<compile_context>
chip_gen: v7x
topology: tpu7x:2x2x1
jax: 0.10.0
libtpu: 0.0.40
codegen_flags: <defaults>
</compile_context>

<pallas_src>
import math

import jax
import jax.numpy as jnp
from jax.experimental import pallas as pl
from jax.experimental.pallas import tpu as pltpu


def _round_up(x: int, m: int) -> int:
    return ((x + m - 1) // m) * m


def _people_mlp_kernel(x_ref, w1_ref, b1_ref, w2_ref, b2_ref, o_ref):
    # x_ref : (tm, Hin)     row tile of the collapsed input
    # w1_ref: (Hin, Hmid)   first linear weight (fully resident in VMEM)
    # b1_ref: (1, Hmid)     first bias (f32)
    # w2_ref: (Hmid, Hout)  second linear weight (fully resident in VMEM)
    # b2_ref: (1, Hout)     second bias (f32)
    # o_ref : (tm, Hout)    output row tile (natural width; no lane padding)
    h = jnp.dot(x_ref[...], w1_ref[...], preferred_element_type=jnp.float32)
    h = jnp.maximum(h + b1_ref[...], 0.0)                  # bias + ReLU on the VPU (f32)
    acc = jnp.dot(h.astype(w2_ref.dtype), w2_ref[...],
                  preferred_element_type=jnp.float32)
    o_ref[...] = (acc + b2_ref[...]).astype(o_ref.dtype)


def people_processor(x, w1, b1, w2, b2, *, tm=2048, compute_dtype=None,
                     x_buffer_count=None):
    """y = relu(x @ w1 + b1) @ w2 + b2, applied over the last dim of x.

    tm:             rows per grid step (sweep 1024-4096; cap ~4096 on v5e
                    unless vmem_limit_bytes is raised; ~8192 ok on v7x with an
                    explicit vmem_limit_bytes).
    compute_dtype:  e.g. jnp.bfloat16 to halve the x read bytes (HBM win, not
                    an MXU win).  Accumulation stays f32.
    x_buffer_count: e.g. 3 on v7x if xprof shows exposed DMA gaps between grid
                    steps; deeper buffering of the x stream only.
    """
    *lead, Hin = x.shape
    Hmid = w1.shape[1]
    Hout = w2.shape[1]
    assert w1.shape[0] == Hin and w2.shape[0] == Hmid

    out_dtype = x.dtype
    M = int(math.prod(lead)) if lead else 1
    if M == 0:                                   # empty-batch edge case
        return jnp.zeros((*lead, Hout), out_dtype)

    x2 = x.reshape(M, Hin)

    # Optional bf16 input/weight stream (halves dominant HBM read traffic).
    if compute_dtype is not None:
        x2 = x2.astype(compute_dtype)
        w1 = w1.astype(compute_dtype)
        w2 = w2.astype(compute_dtype)

    # Kernel-ready bias layout: (1, H) f32.  Pure reshape/astype -> folds
    # into a constant under jit; do it at parameter-prep time if calling eagerly.
    b1p = b1.astype(jnp.float32).reshape(1, Hmid)
    b2p = b2.astype(jnp.float32).reshape(1, Hout)

    # --- Row tiling: big tiles amortize per-grid-step overhead. -------------
    # No wrapper row-padding: grid = cdiv(M, tm); Pallas masks the ragged last
    # block (OOB writes dropped), so the only cost is a few dead rows of
    # compute in one tile.
    tm_eff = max(8, min(tm, _round_up(M, 8)))     # clamp for small inputs
    grid_m = pl.cdiv(M, tm_eff)

    in_bytes = jnp.dtype(x2.dtype).itemsize
    out_bytes = jnp.dtype(out_dtype).itemsize
    cost = pl.CostEstimate(
        flops=2 * M * Hin * Hmid + 2 * M * Hmid * Hout,
        transcendentals=0,
        bytes_accessed=(M * Hin + Hin * Hmid + Hmid * Hout) * in_bytes
                       + M * Hout * out_bytes,
    )

    x_spec_kwargs = {}
    if x_buffer_count is not None:
        x_spec_kwargs["pipeline_mode"] = pl.Buffered(x_buffer_count)

    out2 = pl.pallas_call(
        _people_mlp_kernel,
        out_shape=jax.ShapeDtypeStruct((M, Hout), out_dtype),
        grid_spec=pltpu.PrefetchScalarGridSpec(
            num_scalar_prefetch=0,
            grid=(grid_m,),
            in_specs=[
                pl.BlockSpec((tm_eff, Hin), lambda i: (i, 0),
                             **x_spec_kwargs),                  # x row tile
                pl.BlockSpec((Hin, Hmid),  lambda i: (0, 0)),   # W1 (resident)
                pl.BlockSpec((1, Hmid),    lambda i: (0, 0)),   # b1
                pl.BlockSpec((Hmid, Hout), lambda i: (0, 0)),   # W2 (resident)
                pl.BlockSpec((1, Hout),    lambda i: (0, 0)),   # b2
            ],
            out_specs=pl.BlockSpec((tm_eff, Hout), lambda i: (i, 0)),
        ),
        compiler_params=pltpu.CompilerParams(
            dimension_semantics=("parallel",)),   # shards M across TCs (v7x)
        cost_estimate=cost,
    )(x2, w1, b1p, w2p := w2, b2p)

    return out2.reshape(*lead, Hout)


def _reference(x, w1, b1, w2, b2):
    """Plain-JAX reference of the PEOPLEPROCESSOR forward."""
    *lead, Hin = x.shape
    x2 = x.reshape(-1, Hin)
    h = jnp.maximum(
        jnp.matmul(x2, w1, precision=jax.lax.Precision.HIGHEST) + b1, 0.0)
    y = jnp.matmul(h, w2, precision=jax.lax.Precision.HIGHEST) + b2
    return y.reshape(*lead, w2.shape[1])


if __name__ == "__main__":
    # Shapes implied by the forward: people_cond (..., 91); people_dim = 32.
    batch, n_people, Hin, Hmid, people_dim = 2, 8, 91, 32, 32

    key = jax.random.PRNGKey(0)
    kx, kw1, kb1, kw2, kb2, kx2 = jax.random.split(key, 6)

    x = jax.random.normal(kx, (batch, n_people, Hin), dtype=jnp.float32)

    # PyTorch nn.Linear-style uniform init, bound = 1/sqrt(fan_in).
    bound1 = 1.0 / math.sqrt(Hin)
    w1 = jax.random.uniform(kw1, (Hin, Hmid), minval=-bound1, maxval=bound1,
                            dtype=jnp.float32)
    b1 = jax.random.uniform(kb1, (Hmid,), minval=-bound1, maxval=bound1,
                            dtype=jnp.float32)
    bound2 = 1.0 / math.sqrt(Hmid)
    w2 = jax.random.uniform(kw2, (Hin // Hin * Hmid, people_dim),
                            minval=-bound2, maxval=bound2, dtype=jnp.float32)
    b2 = jax.random.uniform(kb2, (people_dim,), minval=-bound2, maxval=bound2,
                            dtype=jnp.float32)

    # 1) Small happy-path case (single tile, grid=1).
    y = people_processor(x, w1, b1, w2, b2)
    y = jax.block_until_ready(y)
    ref = _reference(x, w1, b1, w2, b2)
    assert y.shape == (batch, n_people, people_dim)
    assert jnp.allclose(y, ref, atol=1e-2, rtol=1e-2)

    # 2) Ragged / multi-step grid case (M=185 rows, tm=64 -> grid=3, last
    #    block masked) to validate the no-padding pipeline path.
    xr = jax.random.normal(kx2, (5, 37, Hin), dtype=jnp.float32)
    yr = people_processor(xr, w1, b1, w2, b2, tm=64)
    yr = jax.block_until_ready(yr)
    refr = _reference(xr, w1, b1, w2, b2)
    assert yr.shape == (5, 37, people_dim)
    assert jnp.allclose(yr, refr, atol=1e-2, rtol=1e-2)

    print("KERNEL_OK")
</pallas_src>

<mosaic_0001>
module attributes {stable_mosaic.version = 11 : i64} {
  func.func @_people_mlp_kernel(%arg0: i32, %arg1: memref<16x91xf32, #tpu.memory_space<vmem>>, %arg2: memref<91x32xf32, #tpu.memory_space<vmem>>, %arg3: memref<1x32xf32, #tpu.memory_space<vmem>>, %arg4: memref<32x32xf32, #tpu.memory_space<vmem>>, %arg5: memref<1x32xf32, #tpu.memory_space<vmem>>, %arg6: memref<16x32xf32, #tpu.memory_space<vmem>>) attributes {dimension_semantics = [#tpu.dimension_semantics<parallel>], iteration_bounds = array<i64: 1>, scalar_prefetch = 0 : i64, scratch_operands = 0 : i64, tpu.core_type = #tpu.core_type<tc>, window_params = [{transform_indices = @transform_0, window_bounds = array<i64: 16, 91>}, {pipeline_mode = #tpu.pipeline_mode<synchronous>, transform_indices = @transform_1, window_bounds = array<i64: 91, 32>}, {pipeline_mode = #tpu.pipeline_mode<synchronous>, transform_indices = @transform_2, window_bounds = array<i64: 1, 32>}, {pipeline_mode = #tpu.pipeline_mode<synchronous>, transform_indices = @transform_3, window_bounds = array<i64: 32, 32>}, {pipeline_mode = #tpu.pipeline_mode<synchronous>, transform_indices = @transform_4, window_bounds = array<i64: 1, 32>}, {transform_indices = @transform_5, window_bounds = array<i64: 16, 32>}]} {
    %c0 = arith.constant 0 : index
    %c0_0 = arith.constant 0 : index
    %0 = vector.load %arg1[%c0, %c0_0] : memref<16x91xf32, #tpu.memory_space<vmem>>, vector<16x91xf32>
    %c0_1 = arith.constant 0 : index
    %c0_2 = arith.constant 0 : index
    %1 = vector.load %arg2[%c0_1, %c0_2] : memref<91x32xf32, #tpu.memory_space<vmem>>, vector<91x32xf32>
    %cst = arith.constant dense<0.000000e+00> : vector<16x32xf32>
    %2 = tpu.matmul %0, %1, %cst {dimension_numbers = #tpu.dot_dimension_numbers<[1], [0], [0], [1], [0, 0, 1, 1], [], []>} : vector<16x91xf32>, vector<91x32xf32>, vector<16x32xf32> -> vector<16x32xf32>
    %c0_3 = arith.constant 0 : index
    %c0_4 = arith.constant 0 : index
    %3 = vector.load %arg3[%c0_3, %c0_4] : memref<1x32xf32, #tpu.memory_space<vmem>>, vector<1x32xf32>
    %4 = vector.broadcast %3 : vector<1x32xf32> to vector<16x32xf32>
    %5 = arith.addf %2, %4 : vector<16x32xf32>
    %cst_5 = arith.constant 0.000000e+00 : f32
    %6 = vector.broadcast %cst_5 : f32 to vector<16x32xf32>
    %7 = arith.maximumf %5, %6 : vector<16x32xf32>
    %c0_6 = arith.constant 0 : index
    %c0_7 = arith.constant 0 : index
    %8 = vector.load %arg4[%c0_6, %c0_7] : memref<32x32xf32, #tpu.memory_space<vmem>>, vector<32x32xf32>
    %cst_8 = arith.constant dense<0.000000e+00> : vector<16x32xf32>
    %9 = tpu.matmul %7, %8, %cst_8 {dimension_numbers = #tpu.dot_dimension_numbers<[1], [0], [0], [1], [0, 0, 1, 1], [], []>} : vector<16x32xf32>, vector<32x32xf32>, vector<16x32xf32> -> vector<16x32xf32>
    %c0_9 = arith.constant 0 : index
    %c0_10 = arith.constant 0 : index
    %10 = vector.load %arg5[%c0_9, %c0_10] : memref<1x32xf32, #tpu.memory_space<vmem>>, vector<1x32xf32>
    %11 = vector.broadcast %10 : vector<1x32xf32> to vector<16x32xf32>
    %12 = arith.addf %9, %11 : vector<16x32xf32>
    %c0_11 = arith.constant 0 : index
    %c0_12 = arith.constant 0 : index
    %13 = vector.load %arg6[%c0_11, %c0_12] : memref<16x32xf32, #tpu.memory_space<vmem>>, vector<16x32xf32>
    tpu.vector_store %arg6[%c0_11, %c0_12], %12 {strides = array<i32>} : memref<16x32xf32, #tpu.memory_space<vmem>>, vector<16x32xf32>,
    return
  }
  func.func @transform_0(%arg0: i32) -> (i32, i32) {
    %c0_i32 = arith.constant 0 : i32
    %c0_i32_0 = arith.constant 0 : i32
    return %arg0, %c0_i32 : i32, i32
  }
  func.func @transform_1(%arg0: i32) -> (i32, i32) {
    %c0_i32 = arith.constant 0 : i32
    %c0_i32_0 = arith.constant 0 : i32
    %c0_i32_1 = arith.constant 0 : i32
    return %c0_i32, %c0_i32_0 : i32, i32
  }
  func.func @transform_2(%arg0: i32) -> (i32, i32) {
    %c0_i32 = arith.constant 0 : i32
    %c0_i32_0 = arith.constant 0 : i32
    %c0_i32_1 = arith.constant 0 : i32
    return %c0_i32, %c0_i32_0 : i32, i32
  }
  func.func @transform_3(%arg0: i32) -> (i32, i32) {
    %c0_i32 = arith.constant 0 : i32
    %c0_i32_0 = arith.constant 0 : i32
    %c0_i32_1 = arith.constant 0 : i32
    return %c0_i32, %c0_i32_0 : i32, i32
  }
  func.func @transform_4(%arg0: i32) -> (i32, i32) {
    %c0_i32 = arith.constant 0 : i32
    %c0_i32_0 = arith.constant 0 : i32
    %c0_i32_1 = arith.constant 0 : i32
    return %c0_i32, %c0_i32_0 : i32, i32
  }
  func.func @transform_5(%arg0: i32) -> (i32, i32) {
    %c0_i32 = arith.constant 0 : i32
    %c0_i32_0 = arith.constant 0 : i32
    return %arg0, %c0_i32 : i32, i32
  }
}

</mosaic_0001>

<llo_original>
// kernel: tpu_custom_call.1
$region0: #{tpu_custom_call.1}
  #allocation0 [shape = 'u32[]', space=smem, size = 0x4, offset = 0x4, fixed_abs, tag = 'smem constant byte address 0x4 - core index']
  #allocation1 [shape = 'u32[144,128]{1,0:T(1,128)}', space=vmem, size = 0x12000, scoped, tag = 'internal scratch']
  %s0 = inlined_call_operand.vmem [shape: f32[16,91], index: 0, kind: input, shape index: {}]
  %s1 = inlined_call_operand.vmem [shape: f32[91,32], index: 1, kind: input, shape index: {}]
  %s2 = inlined_call_operand.vmem [shape: f32[1,32], index: 2, kind: input, shape index: {}]
  %s3 = inlined_call_operand.vmem [shape: f32[32,32], index: 3, kind: input, shape index: {}]
  %s4 = inlined_call_operand.vmem [shape: f32[1,32], index: 4, kind: input, shape index: {}]
  %s5 = inlined_call_operand.hbm [shape: f32[16,32], index: 5, kind: output, shape index: {}]
  %s6 = sld [smem:[#allocation0]]
  $region30: #{tpu_custom_call.1} parent=0
    _
  %s8 = ssub.s32 1, %s6
  %s9 = scalar_select 0, %s8, %s6
  $region1: #{tpu_custom_call.1} parent=0
    #allocation2 [shape = 'u8[8192]{0}', space=vmem, size = 0x2000, scoped, tag = 'output window, operand 0, single buffered']
    #allocation3 [shape = 's32[1]{0}', space=sflag, size = 0x4, scoped, tag = 'scoped memory for tpu_custom_call.1']
    %10 = vsyncpa [#allocation3], 0
    // Predicated region
    $region2: #{tpu_custom_call.1} parent=1 // pred_check
      _
    $region3: #{tpu_custom_call.1} parent=1 // pred_check_branch
      %12 = sbr.rel (0) target = $region5
    $region4: #{tpu_custom_call.1} parent=1 // pred_region
      _
    $region5: #{tpu_custom_call.1} parent=1 // pred_fallthru
      _
    // Predicated region
    $region6: #{tpu_custom_call.1} parent=1 // pred_check
      _
    $region7: #{tpu_custom_call.1} parent=1 // pred_check_branch
      %14 = sbr.rel (0) target = $region9
    $region8: #{tpu_custom_call.1} parent=1 // pred_region
      _
    $region9: #{tpu_custom_call.1} parent=1 // pred_fallthru
      _
    // Predicated region
    $region10: #{tpu_custom_call.1} parent=1 // pred_check
      _
    $region11: #{tpu_custom_call.1} parent=1 // pred_check_branch
      %16 = sbr.rel (0) target = $region13
    $region12: #{tpu_custom_call.1} parent=1 // pred_region
      _
    $region13: #{tpu_custom_call.1} parent=1 // pred_fallthru
      _
    // Predicated region
    $region14: #{tpu_custom_call.1} parent=1 // pred_check
      _
    $region15: #{tpu_custom_call.1} parent=1 // pred_check_branch
      %18 = sbr.rel (0) target = $region17
    $region16: #{tpu_custom_call.1} parent=1 // pred_region
      _
    $region17: #{tpu_custom_call.1} parent=1 // pred_fallthru
      _
    // Predicated region
    $region18: #{tpu_custom_call.1} parent=1 // pred_check
      _
    $region19: #{tpu_custom_call.1} parent=1 // pred_check_branch
      %20 = sbr.rel (0) target = $region21
    $region20: #{tpu_custom_call.1} parent=1 // pred_region
      _
    $region21: #{tpu_custom_call.1} parent=1 // pred_fallthru
      _
    %v21 = vld [vmem:[%s0] sm:$0xff]
    %v22 = vld [vmem:[%s0 + $0x8] sm:$0xff]
    %v23 = vld [vmem:[%s1] sm:$0xff]
    %v24 = vld [vmem:[%s1 + $0x8] sm:$0xff]
    %v25 = vld [vmem:[%s1 + $0x10] sm:$0xff]
    %v26 = vld [vmem:[%s1 + $0x18] sm:$0xff]
    %v27 = vld [vmem:[%s1 + $0x20] sm:$0xff]
    %v28 = vld [vmem:[%s1 + $0x28] sm:$0xff]
    %v29 = vld [vmem:[%s1 + $0x30] sm:$0xff]
    %v30 = vld [vmem:[%s1 + $0x38] sm:$0xff]
    %v31 = vld [vmem:[%s1 + $0x40] sm:$0xff]
    %v32 = vld [vmem:[%s1 + $0x48] sm:$0xff]
    %v33 = vld [vmem:[%s1 + $0x50] sm:$0xff]
    %v34 = vld [vmem:[%s1 + $0x58] sm:$0x7]
    %v35 = vld [vmem:[%s2] sm:$0x1]
    %v37 = vlaneseq
    %v38 = vshrl.u32 %v37, 7
    %v39 = vsub.s32 0, %v38
    %v40 = vrot.slane %v35, %v39
    %vm42 = vcmask 744448
    %v44 = vsel %vm42, %v21, 0
    %v47 = vsel %vm42, %v22, 0
    %vm49 = vcmask 1042432
    %v51 = vsel %vm49, %v34, 0
    %53 = vmatprep.subr.mxu0 0.0
    %54 = vmatpush1.msra.mxu0 %v23
    %55 = vmatprep.subr.mxu0 0.0
    %56 = vmatpush1.msra.mxu0 %v24
    %57 = vmatprep.subr.mxu0 0.0
    %58 = vmatpush1.msra.mxu0 %v25
    %59 = vmatprep.subr.mxu0 0.0
    %60 = vmatpush1.msra.mxu0 %v26
    %61 = vmatprep.subr.mxu0 0.0
    %62 = vmatpush1.msra.mxu0 %v27
    %63 = vmatprep.subr.mxu0 0.0
    %64 = vmatpush1.msra.mxu0 %v28
    %65 = vmatprep.subr.mxu0 0.0
    %66 = vmatpush1.msra.mxu0 %v29
    %67 = vmatprep.subr.mxu0 0.0
    %68 = vmatpush1.msra.mxu0 %v30
    %69 = vmatprep.subr.mxu0 0.0
    %70 = vmatpush1.msra.mxu0 %v31
    %71 = vmatprep.subr.mxu0 0.0
    %72 = vmatpush1.msra.mxu0 %v32
    %73 = vmatprep.subr.mxu0 0.0
    %74 = vmatpush1.msra.mxu0 %v33
    %75 = vmatprep.subr.mxu0 0.0
    %76 = vmatpush1.msra.mxu0 %v51
    %77 = vmatprep.subr.mxu0 0.0
    %78 = vmatpush1.msra.mxu0 0.0
    %79 = vmatprep.subr.mxu0 0.0
    %80 = vmatpush1.msra.mxu0 0.0
    %81 = vmatprep.subr.mxu0 0.0
    %82 = vmatpush1.msra.mxu0 0.0
    %83 = vmatprep.subr.mxu0 0.0
    %84 = vmatpush1.msra.mxu0 0.0
    %85 = vmatprep.subr.mxu0 0.0
    %86 = vmatpush1.msra.mxu0 0.0
    %87 = vmatprep.subr.mxu0 0.0
    %88 = vmatpush1.msra.mxu0 0.0
    %89 = vmatprep.subr.mxu0 0.0
    %90 = vmatpush1.msra.mxu0 0.0
    %91 = vmatprep.subr.mxu0 0.0
    %92 = vmatpush1.msra.mxu0 0.0
    %93 = vmatprep.subr.mxu0 0.0
    %94 = vmatpush1.msra.mxu0 0.0
    %95 = vmatprep.subr.mxu0 0.0
    %96 = vmatpush1.msra.mxu0 0.0
    %97 = vmatprep.subr.mxu0 0.0
    %98 = vmatpush1.msra.mxu0 0.0
    %99 = vmatprep.subr.mxu0 0.0
    %100 = vmatpush1.msra.mxu0 0.0
    %101 = vmatprep.subr.mxu0 0.0
    %102 = vmatpush1.msra.mxu0 0.0
    %103 = vmatprep.subr.mxu0 0.0
    %104 = vmatpush1.msra.mxu0 0.0
    %105 = vmatprep.subr.mxu0 0.0
    %106 = vmatpush1.msra.mxu0 0.0
    %107 = vmatprep.subr.mxu0 0.0
    %108 = vmatpush1.msra.mxu0 0.0
    %109 = vmatprep.subr.mxu0 0.0
    %110 = vmatpush1.msra.mxu0 0.0
    %111 = vmatprep.subr.mxu0 0.0
    %112 = vmatpush1.msra.mxu0 0.0
    %113 = vmatprep.subr.mxu0 0.0
    %114 = vmatpush1.msra.mxu0 0.0
    %115 = vmatprep.subr.mxu0 0.0
    %116 = vmatpush1.msra.mxu0 0.0
    %117 = vmatprep.mubr.f32.mxu0 0.0
    %118 = vmatmul.mubr.f32.gmra.mrb[0].mxu0 %v44
    %v119 = vpop.f32.mrb[0].mxu0
    %v120 = vadd.f32 %v40, %v119
    %v121 = vpop.f32.mrb[0].mxu0
    %122 = vmatprep.mubr.f32.mxu0 0.0
    %123 = vmatmul.mubr.f32.gmra.mrb[0].mxu0 %v47
    %v124 = vpop.f32.mrb[0].mxu0
    %v125 = vadd.f32 %v40, %v124
    %v126 = vpop.f32.mrb[0].mxu0
    %127 = vdwg.mxu0
    %v128 = vmax.f32 %v120, 0.0
    %v129 = vmax.f32 %v125, 0.0
    %v130 = vld [vmem:[%s3] sm:$0xff]
    %v131 = vld [vmem:[%s3 + $0x8] sm:$0xff]
    %v132 = vld [vmem:[%s3 + $0x10] sm:$0xff]
    %v133 = vld [vmem:[%s3 + $0x18] sm:$0xff]
    %v134 = vld [vmem:[%s4] sm:$0x1]
    %v136 = vlaneseq
    %v137 = vshrl.u32 %v136, 7
    %v138 = vsub.s32 0, %v137
    %v139 = vrot.slane %v134, %v138
    %vm141 = vcmask 261120
    %v143 = vsel %vm141, %v128, 0
    %v146 = vsel %vm141, %v129, 0
    %148 = vmatprep.subr.mxu0 0.0
    %149 = vmatpush1.msra.mxu0 %v130
    %150 = vmatprep.subr.mxu0 0.0
    %151 = vmatpush1.msra.mxu0 %v131
    %152 = vmatprep.subr.mxu0 0.0
    %153 = vmatpush1.msra.mxu0 %v132
    %154 = vmatprep.subr.mxu0 0.0
    %155 = vmatpush1.msra.mxu0 %v133
    %156 = vmatprep.subr.mxu0 0.0
    %157 = vmatpush1.msra.mxu0 0.0
    %158 = vmatprep.subr.mxu0 0.0
    %159 = vmatpush1.msra.mxu0 0.0
    %160 = vmatprep.subr.mxu0 0.0
    %161 = vmatpush1.msra.mxu0 0.0
    %162 = vmatprep.subr.mxu0 0.0
    %163 = vmatpush1.msra.mxu0 0.0
    %164 = vmatprep.subr.mxu0 0.0
    %165 = vmatpush1.msra.mxu0 0.0
    %166 = vmatprep.subr.mxu0 0.0
    %167 = vmatpush1.msra.mxu0 0.0
    %168 = vmatprep.subr.mxu0 0.0
    %169 = vmatpush1.msra.mxu0 0.0
    %170 = vmatprep.subr.mxu0 0.0
    %171 = vmatpush1.msra.mxu0 0.0
    %172 = vmatprep.subr.mxu0 0.0
    %173 = vmatpush1.msra.mxu0 0.0
    %174 = vmatprep.subr.mxu0 0.0
    %175 = vmatpush1.msra.mxu0 0.0
    %176 = vmatprep.subr.mxu0 0.0
    %177 = vmatpush1.msra.mxu0 0.0
    %178 = vmatprep.subr.mxu0 0.0
    %179 = vmatpush1.msra.mxu0 0.0
    %180 = vmatprep.subr.mxu0 0.0
    %181 = vmatpush1.msra.mxu0 0.0
    %182 = vmatprep.subr.mxu0 0.0
    %183 = vmatpush1.msra.mxu0 0.0
    %184 = vmatprep.subr.mxu0 0.0
    %185 = vmatpush1.msra.mxu0 0.0
    %186 = vmatprep.subr.mxu0 0.0
    %187 = vmatpush1.msra.mxu0 0.0
    %188 = vmatprep.subr.mxu0 0.0
    %189 = vmatpush1.msra.mxu0 0.0
    %190 = vmatprep.subr.mxu0 0.0
    %191 = vmatpush1.msra.mxu0 0.0
    %192 = vmatprep.subr.mxu0 0.0
    %193 = vmatpush1.msra.mxu0 0.0
    %194 = vmatprep.subr.mxu0 0.0
    %195 = vmatpush1.msra.mxu0 0.0
    %196 = vmatprep.subr.mxu0 0.0
    %197 = vmatpush1.msra.mxu0 0.0
    %198 = vmatprep.subr.mxu0 0.0
    %199 = vmatpush1.msra.mxu0 0.0
    %200 = vmatprep.subr.mxu0 0.0
    %201 = vmatpush1.msra.mxu0 0.0
    %202 = vmatprep.subr.mxu0 0.0
    %203 = vmatpush1.msra.mxu0 0.0
    %204 = vmatprep.subr.mxu0 0.0
    %205 = vmatpush1.msra.mxu0 0.0
    %206 = vmatprep.subr.mxu0 0.0
    %207 = vmatpush1.msra.mxu0 0.0
    %208 = vmatprep.subr.mxu0 0.0
    %209 = vmatpush1.msra.mxu0 0.0
    %210 = vmatprep.subr.mxu0 0.0
    %211 = vmatpush1.msra.mxu0 0.0
    %212 = vmatprep.mubr.f32.mxu0 0.0
    %213 = vmatmul.mubr.f32.gmra.mrb[0].mxu0 %v143
    %v214 = vpop.f32.mrb[0].mxu0
    %v215 = vadd.f32 %v139, %v214
    %v216 = vpop.f32.mrb[0].mxu0
    %217 = vmatprep.mubr.f32.mxu0 0.0
    %218 = vmatmul.mubr.f32.gmra.mrb[0].mxu0 %v146
    %v219 = vpop.f32.mrb[0].mxu0
    %v220 = vadd.f32 %v139, %v219
    %v221 = vpop.f32.mrb[0].mxu0
    %222 = vdwg.mxu0
    %223 = vst.msk [vmem:[#allocation2] sm:$0xff] %vm141, %v215
    %224 = vst.msk [vmem:[#allocation2 + $0x8] sm:$0xff] %vm141, %v220
    // Predicated region
    $region22: #{tpu_custom_call.1} parent=1 // pred_check
      _
    $region23: #{tpu_custom_call.1} parent=1 // pred_check_branch
      %226 = sbr.rel (0) target = $region25
    $region24: #{tpu_custom_call.1} parent=1 // pred_region
      %s228 = ssub.s32 256, 256
      %229 = vsyncadd [#allocation3], %s228
      %s230 = sshll.u32 [#allocation2], 4
      %s231 = int_to_ptr.vmem [resolvable:$true] %s230
      %236 = dma.vmem_to_hbm [thread:$0]  %s231, 256, %s5, [#allocation3], 128, 128, 8
    $region25: #{tpu_custom_call.1} parent=1 // pred_fallthru
      _
    // Predicated region
    $region26: #{tpu_custom_call.1} parent=1 // pred_check
      _
    $region27: #{tpu_custom_call.1} parent=1 // pred_check_branch
      %238 = sbr.rel (0) target = $region29
    $region28: #{tpu_custom_call.1} parent=1 // pred_region
      %239 = dma.done [#allocation3], 256
    $region29: #{tpu_custom_call.1} parent=1 // pred_fallthru
      _
    %240 = vsyncpa [#allocation3], 1

</llo_original>
